<compile_context>
chip_gen: v7x
topology: tpu7x:2x2x1
jax: 0.10.0
libtpu: 0.0.40
codegen_flags: <defaults>
</compile_context>

<pallas_src>
import functools

import jax
import jax.numpy as jnp
from jax import lax
from jax.experimental import pallas as pl
from jax.experimental.pallas import tpu as pltpu


def _label_smoothing_kernel(pred_ref, tgt_ref, out_ref, *, coef_tgt, coef_sum, n_total):
    i = pl.program_id(0)
    pred = pred_ref[...].astype(jnp.float32)            # (TN, C), f32 compute (v5e needs it)
    tn, c = pred.shape

    # Mask rows past the true batch size (last tile of the grid may be padded).
    row_ids = i * tn + lax.broadcasted_iota(jnp.int32, (tn, 1), 0)
    row_valid = row_ids < n_total                        # (TN, 1) bool
    pred = jnp.where(row_valid, pred, 0.0)               # keep padded rows finite

    # log-softmax pieces; all reductions stay 2-D (keepdims) to avoid layout round-trips.
    row_max = jnp.max(pred, axis=-1, keepdims=True)      # (TN, 1)
    shifted = pred - row_max                             # (TN, C)
    lse = jnp.log(jnp.sum(jnp.exp(shifted), axis=-1, keepdims=True))  # (TN, 1)

    # sum_j logp[i, j] = sum_j shifted[i, j] - C * lse[i]
    sum_logp = jnp.sum(shifted, axis=-1, keepdims=True) - jnp.float32(c) * lse

    # logp[i, target[i]] without materializing the smoothed distribution.
    tgt = tgt_ref[...]                                   # (TN, 1) int32
    col_ids = lax.broadcasted_iota(jnp.int32, (tn, c), 1)
    tgt_shifted = jnp.sum(jnp.where(col_ids == tgt, shifted, 0.0),
                          axis=-1, keepdims=True)        # (TN, 1)
    logp_tgt = tgt_shifted - lse

    # per_row = -(confidence - smooth_val) * logp_tgt - smooth_val * sum_logp
    per_row = coef_tgt * logp_tgt + coef_sum * sum_logp  # (TN, 1)
    per_row = jnp.where(row_valid, per_row, 0.0)

    tile_sum = jnp.sum(per_row, axis=0, keepdims=True)   # (1, 1)
    # Broadcast the scalar partial into this tile's own (8,128) output block so the
    # grid axis can be "parallel" (each step owns a distinct block) and the block
    # shape respects the (8,128) tiling rule.  Extra bytes written are negligible.
    out_ref[...] = jnp.broadcast_to(tile_sum, out_ref.shape)


def label_smoothing_loss(pred, target, *, classes, smoothing=0.15, tile_rows=None,
                         tile_budget_bytes=4 * 1024 * 1024):
    """pred: (N, C) float (f32 or bf16), target: (N,) int. Returns scalar f32 loss."""
    n, c = pred.shape
    assert c == classes
    confidence = 1.0 - smoothing
    smooth_val = smoothing / (classes - 0.9999)          # matches the PyTorch module
    coef_tgt = -(confidence - smooth_val)
    coef_sum = -smooth_val

    itemsize = jnp.dtype(pred.dtype).itemsize
    if tile_rows is None:
        if n * c * itemsize <= tile_budget_bytes:
            tile_rows = n                                # single tile: block == full dim
        else:
            tile_rows = (tile_budget_bytes // (c * itemsize)) // 8 * 8
            tile_rows = int(max(8, min(1024, tile_rows)))
    num_tiles = (n + tile_rows - 1) // tile_rows

    tgt2d = target.astype(jnp.int32).reshape(n, 1)       # last dim == full dim (=1)

    kernel = functools.partial(
        _label_smoothing_kernel, coef_tgt=coef_tgt, coef_sum=coef_sum, n_total=n
    )

    partials = pl.pallas_call(
        kernel,
        out_shape=jax.ShapeDtypeStruct((num_tiles * 8, 128), jnp.float32),
        grid=(num_tiles,),
        in_specs=[
            pl.BlockSpec((tile_rows, c), lambda i: (i, 0)),   # pred tile (auto double-buffered)
            pl.BlockSpec((tile_rows, 1), lambda i: (i, 0)),   # target tile
        ],
        out_specs=pl.BlockSpec((8, 128), lambda i: (i, 0)),    # per-tile partial sum block
        compiler_params=pltpu.CompilerParams(
            dimension_semantics=("parallel",),                 # megacore-shardable on v7x
            vmem_limit_bytes=32 * 1024 * 1024,                 # safe on v5e/v6e/v7x
        ),
    )(pred, tgt2d)

    # Each (8,128) block holds one tile's partial sum (broadcast); take one element per tile.
    tile_sums = partials.reshape(num_tiles, 8 * 128)[:, 0]
    # Mean over the TOTAL batch size (not per-tile rows).
    return jnp.sum(tile_sums) / jnp.float32(n)


def _reference(pred, target, *, classes, smoothing=0.15):
    logp = jax.nn.log_softmax(pred.astype(jnp.float32), axis=-1)
    n, c = pred.shape
    smooth_val = smoothing / (classes - 0.9999)
    one_hot = jax.nn.one_hot(target, c, dtype=jnp.float32)
    true_dist = one_hot * (1.0 - smoothing) + (1.0 - one_hot) * smooth_val
    return jnp.mean(jnp.sum(-true_dist * logp, axis=-1))


if __name__ == "__main__":
    key = jax.random.PRNGKey(0)
    kp, kt = jax.random.split(key)

    # Small shapes consistent with the module: batch=8, classes=32.
    N, C = 8, 32
    pred = jax.random.normal(kp, (N, C), dtype=jnp.float32)
    target = jax.random.randint(kt, (N,), 0, C, dtype=jnp.int32)

    loss = jax.block_until_ready(label_smoothing_loss(pred, target, classes=C, smoothing=0.15))
    ref = _reference(pred, target, classes=C, smoothing=0.15)
    assert jnp.allclose(loss, ref, atol=1e-5, rtol=1e-5), (loss, ref)

    # Exercise the tiled path: bf16 input, grid of 3 tiles, padded (masked) last tile.
    kp2, kt2 = jax.random.split(jax.random.PRNGKey(1))
    N2 = 20
    pred2 = jax.random.normal(kp2, (N2, C), dtype=jnp.bfloat16)
    target2 = jax.random.randint(kt2, (N2,), 0, C, dtype=jnp.int32)
    loss2 = jax.block_until_ready(
        label_smoothing_loss(pred2, target2, classes=C, smoothing=0.15, tile_rows=8))
    ref2 = _reference(pred2, target2, classes=C, smoothing=0.15)
    assert jnp.allclose(loss2, ref2, atol=1e-4, rtol=1e-4), (loss2, ref2)

    print("KERNEL_OK")
</pallas_src>

<mosaic_0001>
module attributes {stable_mosaic.version = 11 : i64} {
  func.func @_label_smoothing_kernel(%arg0: i32, %arg1: memref<8x32xf32, #tpu.memory_space<vmem>>, %arg2: memref<8x1xi32, #tpu.memory_space<vmem>>, %arg3: memref<8x128xf32, #tpu.memory_space<vmem>>) attributes {dimension_semantics = [#tpu.dimension_semantics<parallel>], iteration_bounds = array<i64: 1>, scalar_prefetch = 0 : i64, scratch_operands = 0 : i64, tpu.core_type = #tpu.core_type<tc>, window_params = [{transform_indices = @transform_0, window_bounds = array<i64: 8, 32>}, {transform_indices = @transform_1, window_bounds = array<i64: 8, 1>}, {transform_indices = @transform_2, window_bounds = array<i64: 8, 128>}]} {
    %c0 = arith.constant 0 : index
    %c0_0 = arith.constant 0 : index
    %0 = vector.load %arg1[%c0, %c0_0] : memref<8x32xf32, #tpu.memory_space<vmem>>, vector<8x32xf32>
    %c8_i32 = arith.constant 8 : i32
    %1 = arith.muli %arg0, %c8_i32 : i32
    %2 = tpu.iota {dimensions = array<i32: 0>} : vector<8x1xi32>
    %3 = vector.broadcast %1 : i32 to vector<8x1xi32>
    %4 = arith.addi %3, %2 : vector<8x1xi32>
    %c8_i32_1 = arith.constant 8 : i32
    %5 = vector.broadcast %c8_i32_1 : i32 to vector<8x1xi32>
    %6 = arith.cmpi slt, %4, %5 : vector<8x1xi32>
    %cst = arith.constant 0.000000e+00 : f32
    %7 = vector.shape_cast %6 : vector<8x1xi1> to vector<8x1xi1>
    %8 = vector.broadcast %7 : vector<8x1xi1> to vector<8x32xi1>
    %9 = vector.broadcast %cst : f32 to vector<8x32xf32>
    %10 = arith.select %8, %0, %9 : vector<8x32xi1>, vector<8x32xf32>
    %cst_2 = arith.constant dense<0xFF800000> : vector<8xf32>
    %11 = vector.multi_reduction <maximumf>, %10, %cst_2 [1] : vector<8x32xf32> to vector<8xf32>
    %12 = vector.shape_cast %11 : vector<8xf32> to vector<8x1xf32>
    %13 = vector.broadcast %12 : vector<8x1xf32> to vector<8x32xf32>
    %14 = arith.subf %10, %13 : vector<8x32xf32>
    %15 = math.exp %14 : vector<8x32xf32>
    %cst_3 = arith.constant dense<0.000000e+00> : vector<8xf32>
    %16 = vector.multi_reduction <add>, %15, %cst_3 [1] : vector<8x32xf32> to vector<8xf32>
    %17 = vector.shape_cast %16 : vector<8xf32> to vector<8x1xf32>
    %18 = math.log %17 : vector<8x1xf32>
    %cst_4 = arith.constant dense<0.000000e+00> : vector<8xf32>
    %19 = vector.multi_reduction <add>, %14, %cst_4 [1] : vector<8x32xf32> to vector<8xf32>
    %20 = vector.shape_cast %19 : vector<8xf32> to vector<8x1xf32>
    %cst_5 = arith.constant 3.200000e+01 : f32
    %21 = vector.broadcast %cst_5 : f32 to vector<8x1xf32>
    %22 = arith.mulf %21, %18 : vector<8x1xf32>
    %23 = arith.subf %20, %22 : vector<8x1xf32>
    %c0_6 = arith.constant 0 : index
    %c0_7 = arith.constant 0 : index
    %24 = vector.load %arg2[%c0_6, %c0_7] : memref<8x1xi32, #tpu.memory_space<vmem>>, vector<8x1xi32>
    %25 = tpu.iota {dimensions = array<i32: 1>} : vector<8x32xi32>
    %26 = vector.broadcast %24 : vector<8x1xi32> to vector<8x32xi32>
    %27 = arith.cmpi eq, %25, %26 : vector<8x32xi32>
    %cst_8 = arith.constant 0.000000e+00 : f32
    %28 = vector.broadcast %cst_8 : f32 to vector<8x32xf32>
    %29 = arith.select %27, %14, %28 : vector<8x32xi1>, vector<8x32xf32>
    %cst_9 = arith.constant dense<0.000000e+00> : vector<8xf32>
    %30 = vector.multi_reduction <add>, %29, %cst_9 [1] : vector<8x32xf32> to vector<8xf32>
    %31 = vector.shape_cast %30 : vector<8xf32> to vector<8x1xf32>
    %32 = arith.subf %31, %18 : vector<8x1xf32>
    %cst_10 = arith.constant -0.845161318 : f32
    %33 = vector.broadcast %cst_10 : f32 to vector<8x1xf32>
    %34 = arith.mulf %33, %32 : vector<8x1xf32>
    %cst_11 = arith.constant -0.00483869389 : f32
    %35 = vector.broadcast %cst_11 : f32 to vector<8x1xf32>
    %36 = arith.mulf %35, %23 : vector<8x1xf32>
    %37 = arith.addf %34, %36 : vector<8x1xf32>
    %cst_12 = arith.constant 0.000000e+00 : f32
    %38 = vector.broadcast %cst_12 : f32 to vector<8x1xf32>
    %39 = arith.select %6, %37, %38 : vector<8x1xi1>, vector<8x1xf32>
    %cst_13 = arith.constant dense<0.000000e+00> : vector<1xf32>
    %40 = vector.multi_reduction <add>, %39, %cst_13 [0] : vector<8x1xf32> to vector<1xf32>
    %41 = vector.shape_cast %40 : vector<1xf32> to vector<1x1xf32>
    %42 = vector.shape_cast %41 : vector<1x1xf32> to vector<1x1xf32>
    %43 = vector.broadcast %42 : vector<1x1xf32> to vector<8x128xf32>
    %c0_14 = arith.constant 0 : index
    %c0_15 = arith.constant 0 : index
    %44 = vector.load %arg3[%c0_14, %c0_15] : memref<8x128xf32, #tpu.memory_space<vmem>>, vector<8x128xf32>
    tpu.vector_store %arg3[%c0_14, %c0_15], %43 {strides = array<i32>} : memref<8x128xf32, #tpu.memory_space<vmem>>, vector<8x128xf32>,
    return
  }
  func.func @transform_0(%arg0: i32) -> (i32, i32) {
    %c0_i32 = arith.constant 0 : i32
    %c0_i32_0 = arith.constant 0 : i32
    return %arg0, %c0_i32 : i32, i32
  }
  func.func @transform_1(%arg0: i32) -> (i32, i32) {
    %c0_i32 = arith.constant 0 : i32
    %c0_i32_0 = arith.constant 0 : i32
    return %arg0, %c0_i32 : i32, i32
  }
  func.func @transform_2(%arg0: i32) -> (i32, i32) {
    %c0_i32 = arith.constant 0 : i32
    %c0_i32_0 = arith.constant 0 : i32
    return %arg0, %c0_i32 : i32, i32
  }
}

</mosaic_0001>

<llo_original>
// kernel: tpu_custom_call.1
$region0: #{tpu_custom_call.1}
  #allocation0 [shape = 'u32[]', space=smem, size = 0x4, offset = 0x4, fixed_abs, tag = 'smem constant byte address 0x4 - core index']
  #allocation1 [shape = 'u32[144,128]{1,0:T(1,128)}', space=vmem, size = 0x12000, scoped, tag = 'internal scratch']
  %s0 = inlined_call_operand.vmem [shape: f32[8,32], index: 0, kind: input, shape index: {}]
  %s1 = inlined_call_operand.vmem [shape: s32[8,1], index: 1, kind: input, shape index: {}]
  %s2 = inlined_call_operand.hbm [shape: f32[8,128], index: 2, kind: output, shape index: {}]
  %s3 = sld [smem:[#allocation0]]
  $region18: #{tpu_custom_call.1} parent=0
    _
  %s5 = ssub.s32 1, %s3
  %s6 = scalar_select 0, %s5, %s3
  $region1: #{tpu_custom_call.1} parent=0
    #allocation2 [shape = 'u8[4096]{0}', space=vmem, size = 0x1000, scoped, tag = 'output window, operand 0, single buffered']
    #allocation3 [shape = 's32[1]{0}', space=sflag, size = 0x4, scoped, tag = 'scoped memory for tpu_custom_call.1']
    %7 = vsyncpa [#allocation3], 0
    // Predicated region
    $region2: #{tpu_custom_call.1} parent=1 // pred_check
      _
    $region3: #{tpu_custom_call.1} parent=1 // pred_check_branch
      %9 = sbr.rel (0) target = $region5
    $region4: #{tpu_custom_call.1} parent=1 // pred_region
      _
    $region5: #{tpu_custom_call.1} parent=1 // pred_fallthru
      _
    // Predicated region
    $region6: #{tpu_custom_call.1} parent=1 // pred_check
      _
    $region7: #{tpu_custom_call.1} parent=1 // pred_check_branch
      %11 = sbr.rel (0) target = $region9
    $region8: #{tpu_custom_call.1} parent=1 // pred_region
      _
    $region9: #{tpu_custom_call.1} parent=1 // pred_fallthru
      _
    %v12 = vld [vmem:[%s0] sm:$0xff]
    %s13 = smul.u32 0, 8
    %v14 = vlaneseq
    %v15 = vshrl.u32 %v14, 7
    %v16 = vstv %s13
    %v17 = vadd.s32 %v16, %v15
    %vm18 = vcmp.lt.s32.totalorder %v17, 8
    %v19 = vsel %vm18, 1, 0
    %vm20 = vcmp.eq.s32.totalorder %v19, 1
    %v21 = vsel %vm20, %v12, 0.0
    %vm22 = vcmask 261120
    %v23 = vsel %vm22, %v21, -inf
    %24 = vmax.xlane.f32.xlu0 %v23
    %v25 = vpop.xlane.xlu0 %24
    %v26 = vsub.f32 %v21, %v25
    %v27 = vmul.f32 %v26, 1.442695
    %v28 = vpow.pop %v27
    %v29 = vsel %vm22, %v28, 0.0
    %30 = vadd.xlane.f32.xlu0 %v29
    %v31 = vpop.xlane.xlu0 %30
    %v32 = vlog2.pop %v31
    %v33 = vmul.f32 %v32, 0.6931472
    %v34 = vsel %vm22, %v26, 0.0
    %35 = vadd.xlane.f32.xlu0 %v34
    %v36 = vpop.xlane.xlu0 %35
    %v37 = vmul.f32 %v33, 32.0
    %v38 = vsub.f32 %v36, %v37
    %v39 = vld [vmem:[%s1] sm:$0xff]
    %v40 = vlaneseq
    %v41 = vand.u32 %v40, 127
    %42 = vset.pattern.permute.xlu0 0
    %43 = vperm.xlu0 %42, %v39
    %v44 = vpop.permute.xlu0 %43
    %vm45 = vcmp.eq.s32.totalorder %v41, %v44
    %v46 = vsel %vm45, %v26, 0.0
    %v47 = vsel %vm22, %v46, 0.0
    %48 = vadd.xlane.f32.xlu0 %v47
    %v49 = vpop.xlane.xlu0 %48
    %v50 = vsub.f32 %v49, %v33
    %v51 = vmul.f32 %v50, -0.8451613
    %v52 = vmul.f32 %v38, -0.004838694
    %v53 = vadd.f32 %v51, %v52
    %v54 = vsel %vm18, %v53, 0.0
    %v55 = vrot.slane %v54, 4
    %v56 = vadd.f32 %v54, %v55
    %v57 = vrot.slane %v56, 2
    %v58 = vadd.f32 %v56, %v57
    %v59 = vrot.slane %v58, 1
    %v60 = vadd.f32 %v58, %v59
    %61 = vst [vmem:[#allocation2] sm:$0xff] %v60
    // Predicated region
    $region10: #{tpu_custom_call.1} parent=1 // pred_check
      _
    $region11: #{tpu_custom_call.1} parent=1 // pred_check_branch
      %63 = sbr.rel (0) target = $region13
    $region12: #{tpu_custom_call.1} parent=1 // pred_region
      %s65 = ssub.s32 128, 128
      %66 = vsyncadd [#allocation3], %s65
      %s68 = sshll.u32 [#allocation2], 4
      %s69 = int_to_ptr.vmem [resolvable:$true] %s68
      %71 = dma.vmem_to_hbm [thread:$0]  %s69, 128, %s2, [#allocation3]
    $region13: #{tpu_custom_call.1} parent=1 // pred_fallthru
      _
    // Predicated region
    $region14: #{tpu_custom_call.1} parent=1 // pred_check
      _
    $region15: #{tpu_custom_call.1} parent=1 // pred_check_branch
      %73 = sbr.rel (0) target = $region17
    $region16: #{tpu_custom_call.1} parent=1 // pred_region
      %74 = dma.done [#allocation3], 128
    $region17: #{tpu_custom_call.1} parent=1 // pred_fallthru
      _
    %75 = vsyncpa [#allocation3], 1

</llo_original>
